<compile_context>
chip_gen: v5e
topology: v5e:2x2
jax: 0.10.0
libtpu: 0.0.40
codegen_flags: <defaults>
</compile_context>

<pallas_src>
import jax
import jax.numpy as jnp
from jax import lax
from jax.experimental import pallas as pl
from jax.experimental.pallas import tpu as pltpu


# ----------------------------------------------------------------------------
# Pallas kernel: in-kernel conv (shifted dots) + ReLU + mask + sum-over-past,
# fused grouped MLP (two accumulated dots + SiLU + block-diagonal layer 2).
# ----------------------------------------------------------------------------
def critics_kernel(x_ref,      # (TB*Pp, C)  padded past activations, flattened (batch, past)
                   mask_ref,   # (TB*Pp, 1)  f32 keep-mask (0 on all-padding / invalid rows)
                   state_ref,  # (TB, Ds)
                   wc_ref,     # (K, C, C)   conv taps: wc[k][c_in, c_out]
                   bc_ref,     # (1, C)      f32 conv bias
                   w1s_ref,    # (Ds, G*H1)  layer-1 weight, state slice
                   w1a_ref,    # (C,  G*H1)  layer-1 weight, past-action slice
                   b1_ref,     # (1, G*H1)   f32
                   w2_ref,     # (G*H1, G)   block-diagonal grouped layer-2 weight
                   b2_ref,     # (1, G)      f32
                   out_ref):   # (TB, G)     f32
    R, C = x_ref.shape
    TB = state_ref.shape[0]
    Pp = R // TB                    # padded 'past' length (multiple of 8)
    K = wc_ref.shape[0]

    # ----- Conv1d over 'past': K accumulated MXU dots over row-shifted views -----
    x = x_ref[...]                                                   # (TB*Pp, C)
    acc = jnp.dot(x, wc_ref[0], preferred_element_type=jnp.float32)  # tap k = 0
    for k in range(1, K):                                            # K tiny; static unroll
        # shift rows up by k; zero-filled tail rows only feed masked outputs
        xs = jnp.concatenate([x[k:, :], jnp.zeros((k, C), x.dtype)], axis=0)
        acc = acc + jnp.dot(xs, wc_ref[k], preferred_element_type=jnp.float32)
    conv = jnp.maximum(acc + bc_ref[...], 0.0) * mask_ref[...]       # bias, ReLU, keep-mask (f32)
    # Pp is sublane-aligned (multiple of 8) so this reshape is layout-trivial.
    act_feat = conv.reshape(TB, Pp, C).sum(axis=1)                   # sum over 'past' -> (TB, C)

    # ----- Fused grouped MLP: state-dot + act-dot accumulated (no lane concat) -----
    h = (jnp.dot(state_ref[...], w1s_ref[...], preferred_element_type=jnp.float32)
         + jnp.dot(act_feat.astype(w1a_ref.dtype), w1a_ref[...],
                   preferred_element_type=jnp.float32)
         + b1_ref[...])                                              # (TB, G*H1) f32
    h = h * jax.nn.sigmoid(h)                                        # SiLU in f32 (EUP)
    out = jnp.dot(h.astype(w2_ref.dtype), w2_ref[...],
                  preferred_element_type=jnp.float32) + b2_ref[...]  # (TB, G)
    out_ref[...] = out.astype(out_ref.dtype)                         # one lane-dense store


# ----------------------------------------------------------------------------
# Helpers
# ----------------------------------------------------------------------------
def _round_up(n, m):
    return (n + m - 1) // m * m


def exclusive_cumsum(vals):
    c = jnp.cumsum(jnp.asarray(vals, dtype=jnp.int32))
    return jnp.concatenate([jnp.zeros((1,), c.dtype), c[:-1]])


# ----------------------------------------------------------------------------
# One-time weight packing (hoisted out of the per-step path; cache the result)
# ----------------------------------------------------------------------------
def pack_critics_params(params, num_actions, compute_dtype=jnp.bfloat16):
    cd = compute_dtype
    if not isinstance(num_actions, (tuple, list)):
        num_actions = (num_actions,)
    offsets = exclusive_cumsum(num_actions)                          # (A,)

    conv_w = params['conv_w']                                        # (C_out, C_in, K)
    C, _, K = conv_w.shape
    assert K % 2 == 1, "past_action_conv_kernel must be odd for 'same' padding"
    wc = jnp.transpose(conv_w, (2, 1, 0)).astype(cd)                 # (K, C_in, C_out)
    bc = params['conv_b'].reshape(1, C).astype(jnp.float32)

    G, Din, H1 = params['w1'].shape
    Ds = Din - C
    assert Ds > 0
    GH1 = G * H1
    w1 = jnp.transpose(params['w1'], (1, 0, 2)).reshape(Din, GH1)    # (Ds+C, G*H1)
    w1s = w1[:Ds].astype(cd)                                         # state slice
    w1a = w1[Ds:].astype(cd)                                         # past-action slice
    b1 = params['b1'].reshape(1, GH1).astype(jnp.float32)

    eye = jnp.eye(G, dtype=params['w2'].dtype)
    w2 = (params['w2'][:, :, 0][:, :, None] * eye[:, None, :]).reshape(GH1, G).astype(cd)
    b2 = params['b2'].reshape(1, G).astype(jnp.float32)

    return dict(emb=params['emb'].astype(cd), offsets=offsets,
                wc=wc, bc=bc, w1s=w1s, w1a=w1a, b1=b1, w2=w2, b2=b2,
                K=K, pad=K // 2, C=C, Ds=Ds, G=G, GH1=GH1, compute_dtype=cd)


# ----------------------------------------------------------------------------
# Forward wrapper (embedding gather + padding/flattening glue + pallas_call)
# ----------------------------------------------------------------------------
def critics_forward(state, packed, past_actions=None, rewards=None, batch_tile=512):
    cd = packed['compute_dtype']
    offsets = packed['offsets']
    A = offsets.shape[0]
    C, Ds, G, GH1, K, pad = (packed[k] for k in ('C', 'Ds', 'G', 'GH1', 'K', 'pad'))

    no_batch = state.ndim == 1
    if no_batch:
        state = state[None, :]
        if past_actions is not None:
            past_actions = past_actions[None, ...]
    B = state.shape[0]
    assert state.shape[-1] == Ds
    if past_actions is None:
        past_actions = jnp.full((B, 1, A), -1, dtype=jnp.int32)

    # --- embedding gather + 'past' zero padding (wrapper glue) ---
    is_padding = past_actions < 0
    idx = jnp.where(is_padding, 0, past_actions + offsets)           # masked_fill after offset
    emb = jnp.take(packed['emb'], idx, axis=0)                       # (B, P, A, D) gather
    P = emb.shape[1]
    assert emb.shape[2] * emb.shape[3] == C
    x = emb.reshape(B, P, C)                                         # 'b past a d -> b past (a d)'
    Pp = _round_up(P + 2 * pad, 8)                                   # sublane-aligned padded past
    x = jnp.pad(x, ((0, 0), (pad, Pp - P - pad), (0, 0)))            # zero-pad along 'past'

    keep = (~jnp.all(is_padding, axis=-1)).astype(jnp.float32)       # (B, P)
    keep = jnp.pad(keep, ((0, 0), (0, Pp - P)))                      # invalid conv rows -> 0

    # --- batch tile selection (amortize step overhead, bound VMEM, >=2 steps when big) ---
    TB = min(batch_tile, max(8, _round_up(B, 8)))
    if B > 256 and _round_up(B, TB) // TB < 2:                       # v7x: use both TensorCores
        TB = max(8, _round_up(-(-B // 2), 8))
    itemsize = jnp.dtype(cd).itemsize
    per_row = Pp * C * itemsize + Pp * 4 + Ds * itemsize + G * 4     # bytes / batch element
    vmem_budget = 8 << 20                                            # ~8 MiB of pipelined blocks
    TB = min(TB, max(8, (vmem_budget // (2 * per_row)) // 8 * 8))
    Bp = _round_up(B, TB)

    if Bp != B:
        padb = Bp - B
        x = jnp.pad(x, ((0, padb), (0, 0), (0, 0)))
        keep = jnp.pad(keep, ((0, padb), (0, 0)))
        state = jnp.pad(state, ((0, padb), (0, 0)))

    x_flat = x.reshape(Bp * Pp, C).astype(cd)                        # no im2col, no HBM lane pad
    mask_flat = keep.reshape(Bp * Pp, 1)
    state_p = state.astype(cd)

    Rb = TB * Pp
    out = pl.pallas_call(
        critics_kernel,
        out_shape=jax.ShapeDtypeStruct((Bp, G), jnp.float32),
        grid_spec=pltpu.PrefetchScalarGridSpec(
            num_scalar_prefetch=0,
            grid=(Bp // TB,),
            in_specs=[
                pl.BlockSpec((Rb, C), lambda i: (i, 0)),             # activations
                pl.BlockSpec((Rb, 1), lambda i: (i, 0)),             # keep-mask
                pl.BlockSpec((TB, Ds), lambda i: (i, 0)),            # state
                pl.BlockSpec((K, C, C), lambda i: (0, 0, 0)),        # conv taps (resident)
                pl.BlockSpec((1, C), lambda i: (0, 0)),              # conv bias
                pl.BlockSpec((Ds, GH1), lambda i: (0, 0)),           # layer-1 state weight
                pl.BlockSpec((C, GH1), lambda i: (0, 0)),            # layer-1 action weight
                pl.BlockSpec((1, GH1), lambda i: (0, 0)),            # layer-1 bias
                pl.BlockSpec((GH1, G), lambda i: (0, 0)),            # block-diag layer-2 weight
                pl.BlockSpec((1, G), lambda i: (0, 0)),              # layer-2 bias
            ],
            out_specs=pl.BlockSpec((TB, G), lambda i: (i, 0)),
        ),
        compiler_params=pltpu.CompilerParams(
            dimension_semantics=("parallel",)),
    )(x_flat, mask_flat, state_p, packed['wc'], packed['bc'],
      packed['w1s'], packed['w1a'], packed['b1'], packed['w2'], packed['b2'])

    values = out[:B]                                                 # drop batch padding
    if no_batch:
        values = values[0]
    if rewards is None:
        return values
    return jnp.mean((rewards - values) ** 2)                         # F.mse_loss


# ----------------------------------------------------------------------------
# Pure-JAX reference (mirrors PyTorch semantics; HIGHEST precision dots)
# ----------------------------------------------------------------------------
def critics_ref(state, past_actions, params, num_actions):
    hp = lax.Precision.HIGHEST
    offsets = exclusive_cumsum(num_actions)
    is_padding = past_actions < 0
    idx = jnp.where(is_padding, 0, past_actions + offsets)
    emb = params['emb'][idx]                                         # (B, P, A, D)
    B, P, A, D = emb.shape
    x = jnp.transpose(emb.reshape(B, P, A * D), (0, 2, 1))           # (B, C, P)  NCW
    K = params['conv_w'].shape[-1]
    y = lax.conv_general_dilated(x, params['conv_w'], window_strides=(1,),
                                 padding=[(K // 2, K // 2)],
                                 dimension_numbers=('NCH', 'OIH', 'NCH'),
                                 precision=hp)
    y = y + params['conv_b'][None, :, None]
    y = jnp.maximum(y, 0.0)
    all_pad = jnp.all(is_padding, axis=-1)                           # (B, P)
    y = jnp.where(all_pad[:, None, :], 0.0, y)
    act_feat = jnp.sum(y, axis=-1)                                   # (B, C)
    feat = jnp.concatenate([state, act_feat], axis=-1)
    h = jnp.einsum('bi,gio->bgo', feat, params['w1'], precision=hp) + params['b1'][None]
    h = jax.nn.silu(h)
    v = jnp.einsum('bgi,gio->bgo', h, params['w2'], precision=hp) + params['b2'][None]
    return v[..., 0]


# ----------------------------------------------------------------------------
if __name__ == "__main__":
    key = jax.random.PRNGKey(0)

    num_actions = (3, 5)          # two action sets
    A = len(num_actions)
    T = sum(num_actions)          # total embedding rows
    D_EMB = 16                    # dim_action_embed
    C = D_EMB * A                 # dim_all_actions = 32
    K = 3                         # past_action_conv_kernel
    G = 4                         # num_critics
    DS = 32                       # dims[0] (state dim)
    H1 = 16                       # dims[1]
    B, P = 8, 4                   # batch, past length

    ks = jax.random.split(key, 10)
    s = 0.1
    params = dict(
        emb=jax.random.normal(ks[0], (T, D_EMB), jnp.float32) * s,
        conv_w=jax.random.normal(ks[1], (C, C, K), jnp.float32) * s,
        conv_b=jax.random.normal(ks[2], (C,), jnp.float32) * s,
        w1=jax.random.normal(ks[3], (G, DS + C, H1), jnp.float32) * s,
        b1=jax.random.normal(ks[4], (G, H1), jnp.float32) * s,
        w2=jax.random.normal(ks[5], (G, H1, 1), jnp.float32) * s,
        b2=jax.random.normal(ks[6], (G, 1), jnp.float32) * s,
    )

    state = jax.random.normal(ks[7], (B, DS), jnp.float32)
    past_actions = jax.random.randint(ks[8], (B, P, A), 0, min(num_actions)).astype(jnp.int32)
    past_actions = past_actions.at[0, 0, :].set(-1)    # one fully-padded timestep
    past_actions = past_actions.at[1, 2, 0].set(-1)    # one partially padded entry
    rewards = jax.random.normal(ks[9], (B, G), jnp.float32)

    ref = critics_ref(state, past_actions, params, num_actions)

    # pack once (hoisted out of the per-call path)
    packed_f32 = pack_critics_params(params, num_actions, compute_dtype=jnp.float32)
    packed_bf16 = pack_critics_params(params, num_actions, compute_dtype=jnp.bfloat16)

    # values path (f32 operands; tolerance accounts for MXU default-precision matmul)
    values = jax.block_until_ready(
        critics_forward(state, packed_f32, past_actions=past_actions))
    assert values.shape == (B, G)
    assert jnp.allclose(values, ref, atol=1e-2, rtol=1e-2), (values, ref)

    # values path (bf16 operands, f32 accumulation) -> looser tolerance
    values_bf16 = jax.block_until_ready(
        critics_forward(state, packed_bf16, past_actions=past_actions))
    assert values_bf16.shape == (B, G)
    assert jnp.allclose(values_bf16, ref, atol=3e-2, rtol=3e-2), (values_bf16, ref)

    # mse-loss path
    loss = jax.block_until_ready(
        critics_forward(state, packed_f32, past_actions=past_actions, rewards=rewards))
    ref_loss = jnp.mean((rewards - ref) ** 2)
    assert jnp.allclose(loss, ref_loss, atol=2e-2, rtol=2e-2), (loss, ref_loss)

    # no-batch / no-past-actions path
    v1 = jax.block_until_ready(critics_forward(state[0], packed_f32))
    assert v1.shape == (G,)

    print("KERNEL_OK")
</pallas_src>

<mosaic_0001>
module attributes {stable_mosaic.version = 11 : i64} {
  func.func @critics_kernel(%arg0: i32, %arg1: memref<64x32xf32, #tpu.memory_space<vmem>>, %arg2: memref<64x1xf32, #tpu.memory_space<vmem>>, %arg3: memref<8x32xf32, #tpu.memory_space<vmem>>, %arg4: memref<3x32x32xf32, #tpu.memory_space<vmem>>, %arg5: memref<1x32xf32, #tpu.memory_space<vmem>>, %arg6: memref<32x64xf32, #tpu.memory_space<vmem>>, %arg7: memref<32x64xf32, #tpu.memory_space<vmem>>, %arg8: memref<1x64xf32, #tpu.memory_space<vmem>>, %arg9: memref<64x4xf32, #tpu.memory_space<vmem>>, %arg10: memref<1x4xf32, #tpu.memory_space<vmem>>, %arg11: memref<8x4xf32, #tpu.memory_space<vmem>>) attributes {dimension_semantics = [#tpu.dimension_semantics<parallel>], iteration_bounds = array<i64: 1>, scalar_prefetch = 0 : i64, scratch_operands = 0 : i64, tpu.core_type = #tpu.core_type<tc>, window_params = [{transform_indices = @transform_0, window_bounds = array<i64: 64, 32>}, {transform_indices = @transform_1, window_bounds = array<i64: 64, 1>}, {transform_indices = @transform_2, window_bounds = array<i64: 8, 32>}, {pipeline_mode = #tpu.pipeline_mode<synchronous>, transform_indices = @transform_3, window_bounds = array<i64: 3, 32, 32>}, {pipeline_mode = #tpu.pipeline_mode<synchronous>, transform_indices = @transform_4, window_bounds = array<i64: 1, 32>}, {pipeline_mode = #tpu.pipeline_mode<synchronous>, transform_indices = @transform_5, window_bounds = array<i64: 32, 64>}, {pipeline_mode = #tpu.pipeline_mode<synchronous>, transform_indices = @transform_6, window_bounds = array<i64: 32, 64>}, {pipeline_mode = #tpu.pipeline_mode<synchronous>, transform_indices = @transform_7, window_bounds = array<i64: 1, 64>}, {pipeline_mode = #tpu.pipeline_mode<synchronous>, transform_indices = @transform_8, window_bounds = array<i64: 64, 4>}, {pipeline_mode = #tpu.pipeline_mode<synchronous>, transform_indices = @transform_9, window_bounds = array<i64: 1, 4>}, {transform_indices = @transform_10, window_bounds = array<i64: 8, 4>}]} {
    %c0 = arith.constant 0 : index
    %c0_0 = arith.constant 0 : index
    %0 = vector.load %arg1[%c0, %c0_0] : memref<64x32xf32, #tpu.memory_space<vmem>>, vector<64x32xf32>
    %c0_1 = arith.constant 0 : index
    %c0_2 = arith.constant 0 : index
    %c0_3 = arith.constant 0 : index
    %1 = vector.load %arg4[%c0_1, %c0_2, %c0_3] : memref<3x32x32xf32, #tpu.memory_space<vmem>>, vector<1x32x32xf32>
    %2 = vector.shape_cast %1 : vector<1x32x32xf32> to vector<32x32xf32>
    %cst = arith.constant dense<0.000000e+00> : vector<64x32xf32>
    %3 = tpu.matmul %0, %2, %cst {dimension_numbers = #tpu.dot_dimension_numbers<[1], [0], [0], [1], [0, 0, 1, 1], [], []>} : vector<64x32xf32>, vector<32x32xf32>, vector<64x32xf32> -> vector<64x32xf32>
    %4 = vector.extract_strided_slice %0 {offsets = [1, 0], sizes = [63, 32], strides = [1, 1]} : vector<64x32xf32> to vector<63x32xf32>
    %cst_4 = arith.constant 0.000000e+00 : f32
    %5 = vector.broadcast %cst_4 : f32 to vector<1x32xf32>
    %6 = tpu.concatenate %4, %5 in 0 : vector<63x32xf32>, vector<1x32xf32> -> vector<64x32xf32>
    %c1 = arith.constant 1 : index
    %c0_5 = arith.constant 0 : index
    %c0_6 = arith.constant 0 : index
    %7 = vector.load %arg4[%c1, %c0_5, %c0_6] : memref<3x32x32xf32, #tpu.memory_space<vmem>>, vector<1x32x32xf32>
    %8 = vector.shape_cast %7 : vector<1x32x32xf32> to vector<32x32xf32>
    %cst_7 = arith.constant dense<0.000000e+00> : vector<64x32xf32>
    %9 = tpu.matmul %6, %8, %cst_7 {dimension_numbers = #tpu.dot_dimension_numbers<[1], [0], [0], [1], [0, 0, 1, 1], [], []>} : vector<64x32xf32>, vector<32x32xf32>, vector<64x32xf32> -> vector<64x32xf32>
    %10 = arith.addf %3, %9 : vector<64x32xf32>
    %11 = vector.extract_strided_slice %0 {offsets = [2, 0], sizes = [62, 32], strides = [1, 1]} : vector<64x32xf32> to vector<62x32xf32>
    %cst_8 = arith.constant 0.000000e+00 : f32
    %12 = vector.broadcast %cst_8 : f32 to vector<2x32xf32>
    %13 = tpu.concatenate %11, %12 in 0 : vector<62x32xf32>, vector<2x32xf32> -> vector<64x32xf32>
    %c2 = arith.constant 2 : index
    %c0_9 = arith.constant 0 : index
    %c0_10 = arith.constant 0 : index
    %14 = vector.load %arg4[%c2, %c0_9, %c0_10] : memref<3x32x32xf32, #tpu.memory_space<vmem>>, vector<1x32x32xf32>
    %15 = vector.shape_cast %14 : vector<1x32x32xf32> to vector<32x32xf32>
    %cst_11 = arith.constant dense<0.000000e+00> : vector<64x32xf32>
    %16 = tpu.matmul %13, %15, %cst_11 {dimension_numbers = #tpu.dot_dimension_numbers<[1], [0], [0], [1], [0, 0, 1, 1], [], []>} : vector<64x32xf32>, vector<32x32xf32>, vector<64x32xf32> -> vector<64x32xf32>
    %17 = arith.addf %10, %16 : vector<64x32xf32>
    %c0_12 = arith.constant 0 : index
    %c0_13 = arith.constant 0 : index
    %18 = vector.load %arg5[%c0_12, %c0_13] : memref<1x32xf32, #tpu.memory_space<vmem>>, vector<1x32xf32>
    %19 = vector.broadcast %18 : vector<1x32xf32> to vector<64x32xf32>
    %20 = arith.addf %17, %19 : vector<64x32xf32>
    %cst_14 = arith.constant 0.000000e+00 : f32
    %21 = vector.broadcast %cst_14 : f32 to vector<64x32xf32>
    %22 = arith.maximumf %20, %21 : vector<64x32xf32>
    %c0_15 = arith.constant 0 : index
    %c0_16 = arith.constant 0 : index
    %23 = vector.load %arg2[%c0_15, %c0_16] : memref<64x1xf32, #tpu.memory_space<vmem>>, vector<64x1xf32>
    %24 = vector.broadcast %23 : vector<64x1xf32> to vector<64x32xf32>
    %25 = arith.mulf %22, %24 : vector<64x32xf32>
    %26 = vector.shape_cast %25 : vector<64x32xf32> to vector<8x8x32xf32>
    %cst_17 = arith.constant dense<0.000000e+00> : vector<8x32xf32>
    %27 = vector.multi_reduction <add>, %26, %cst_17 [1] : vector<8x8x32xf32> to vector<8x32xf32>
    %c0_18 = arith.constant 0 : index
    %c0_19 = arith.constant 0 : index
    %28 = vector.load %arg3[%c0_18, %c0_19] : memref<8x32xf32, #tpu.memory_space<vmem>>, vector<8x32xf32>
    %c0_20 = arith.constant 0 : index
    %c0_21 = arith.constant 0 : index
    %29 = vector.load %arg6[%c0_20, %c0_21] : memref<32x64xf32, #tpu.memory_space<vmem>>, vector<32x64xf32>
    %cst_22 = arith.constant dense<0.000000e+00> : vector<8x64xf32>
    %30 = tpu.matmul %28, %29, %cst_22 {dimension_numbers = #tpu.dot_dimension_numbers<[1], [0], [0], [1], [0, 0, 1, 1], [], []>} : vector<8x32xf32>, vector<32x64xf32>, vector<8x64xf32> -> vector<8x64xf32>
    %c0_23 = arith.constant 0 : index
    %c0_24 = arith.constant 0 : index
    %31 = vector.load %arg7[%c0_23, %c0_24] : memref<32x64xf32, #tpu.memory_space<vmem>>, vector<32x64xf32>
    %cst_25 = arith.constant dense<0.000000e+00> : vector<8x64xf32>
    %32 = tpu.matmul %27, %31, %cst_25 {dimension_numbers = #tpu.dot_dimension_numbers<[1], [0], [0], [1], [0, 0, 1, 1], [], []>} : vector<8x32xf32>, vector<32x64xf32>, vector<8x64xf32> -> vector<8x64xf32>
    %33 = arith.addf %30, %32 : vector<8x64xf32>
    %c0_26 = arith.constant 0 : index
    %c0_27 = arith.constant 0 : index
    %34 = vector.load %arg8[%c0_26, %c0_27] : memref<1x64xf32, #tpu.memory_space<vmem>>, vector<1x64xf32>
    %35 = vector.broadcast %34 : vector<1x64xf32> to vector<8x64xf32>
    %36 = arith.addf %33, %35 : vector<8x64xf32>
    %37 = arith.negf %36 : vector<8x64xf32>
    %38 = math.exp %37 : vector<8x64xf32>
    %cst_28 = arith.constant 1.000000e+00 : f32
    %39 = vector.broadcast %cst_28 : f32 to vector<8x64xf32>
    %40 = arith.addf %39, %38 : vector<8x64xf32>
    %41 = arith.divf %39, %40 : vector<8x64xf32>
    %42 = arith.mulf %36, %41 : vector<8x64xf32>
    %c0_29 = arith.constant 0 : index
    %c0_30 = arith.constant 0 : index
    %43 = vector.load %arg9[%c0_29, %c0_30] : memref<64x4xf32, #tpu.memory_space<vmem>>, vector<64x4xf32>
    %cst_31 = arith.constant dense<0.000000e+00> : vector<8x4xf32>
    %44 = tpu.matmul %42, %43, %cst_31 {dimension_numbers = #tpu.dot_dimension_numbers<[1], [0], [0], [1], [0, 0, 1, 1], [], []>} : vector<8x64xf32>, vector<64x4xf32>, vector<8x4xf32> -> vector<8x4xf32>
    %c0_32 = arith.constant 0 : index
    %c0_33 = arith.constant 0 : index
    %45 = vector.load %arg10[%c0_32, %c0_33] : memref<1x4xf32, #tpu.memory_space<vmem>>, vector<1x4xf32>
    %46 = vector.broadcast %45 : vector<1x4xf32> to vector<8x4xf32>
    %47 = arith.addf %44, %46 : vector<8x4xf32>
    %c0_34 = arith.constant 0 : index
    %c0_35 = arith.constant 0 : index
    %48 = vector.load %arg11[%c0_34, %c0_35] : memref<8x4xf32, #tpu.memory_space<vmem>>, vector<8x4xf32>
    tpu.vector_store %arg11[%c0_34, %c0_35], %47 {strides = array<i32>} : memref<8x4xf32, #tpu.memory_space<vmem>>, vector<8x4xf32>,
    return
  }
  func.func @transform_0(%arg0: i32) -> (i32, i32) {
    %c0_i32 = arith.constant 0 : i32
    %c0_i32_0 = arith.constant 0 : i32
    return %arg0, %c0_i32 : i32, i32
  }
  func.func @transform_1(%arg0: i32) -> (i32, i32) {
    %c0_i32 = arith.constant 0 : i32
    %c0_i32_0 = arith.constant 0 : i32
    return %arg0, %c0_i32 : i32, i32
  }
  func.func @transform_2(%arg0: i32) -> (i32, i32) {
    %c0_i32 = arith.constant 0 : i32
    %c0_i32_0 = arith.constant 0 : i32
    return %arg0, %c0_i32 : i32, i32
  }
  func.func @transform_3(%arg0: i32) -> (i32, i32, i32) {
    %c0_i32 = arith.constant 0 : i32
    %c0_i32_0 = arith.constant 0 : i32
    %c0_i32_1 = arith.constant 0 : i32
    %c0_i32_2 = arith.constant 0 : i32
    return %c0_i32, %c0_i32_0, %c0_i32_1 : i32, i32, i32
  }
  func.func @transform_4(%arg0: i32) -> (i32, i32) {
    %c0_i32 = arith.constant 0 : i32
    %c0_i32_0 = arith.constant 0 : i32
    %c0_i32_1 = arith.constant 0 : i32
    return %c0_i32, %c0_i32_0 : i32, i32
  }
  func.func @transform_5(%arg0: i32) -> (i32, i32) {
    %c0_i32 = arith.constant 0 : i32
    %c0_i32_0 = arith.constant 0 : i32
    %c0_i32_1 = arith.constant 0 : i32
    return %c0_i32, %c0_i32_0 : i32, i32
  }
  func.func @transform_6(%arg0: i32) -> (i32, i32) {
    %c0_i32 = arith.constant 0 : i32
    %c0_i32_0 = arith.constant 0 : i32
    %c0_i32_1 = arith.constant 0 : i32
    return %c0_i32, %c0_i32_0 : i32, i32
  }
  func.func @transform_7(%arg0: i32) -> (i32, i32) {
    %c0_i32 = arith.constant 0 : i32
    %c0_i32_0 = arith.constant 0 : i32
    %c0_i32_1 = arith.constant 0 : i32
    return %c0_i32, %c0_i32_0 : i32, i32
  }
  func.func @transform_8(%arg0: i32) -> (i32, i32) {
    %c0_i32 = arith.constant 0 : i32
    %c0_i32_0 = arith.constant 0 : i32
    %c0_i32_1 = arith.constant 0 : i32
    return %c0_i32, %c0_i32_0 : i32, i32
  }
  func.func @transform_9(%arg0: i32) -> (i32, i32) {
    %c0_i32 = arith.constant 0 : i32
    %c0_i32_0 = arith.constant 0 : i32
    %c0_i32_1 = arith.constant 0 : i32
    return %c0_i32, %c0_i32_0 : i32, i32
  }
  func.func @transform_10(%arg0: i32) -> (i32, i32) {
    %c0_i32 = arith.constant 0 : i32
    %c0_i32_0 = arith.constant 0 : i32
    return %arg0, %c0_i32 : i32, i32
  }
}

</mosaic_0001>

<llo_original>
// kernel: tpu_custom_call.1
$region0: #{tpu_custom_call.1}
  #allocation0 [shape = 'u32[]', space=smem, size = 0x4, offset = 0x4, fixed_abs, tag = 'smem constant byte address 0x4 - core index']
  #allocation1 [shape = 'u32[72,128]{1,0:T(1,128)}', space=vmem, size = 0x9000, scoped, tag = 'internal scratch']
  %s0 = inlined_call_operand.vmem [shape: f32[64,32], index: 0, kind: input, shape index: {}]
  %s1 = inlined_call_operand.vmem [shape: f32[64,1], index: 1, kind: input, shape index: {}]
  %s2 = inlined_call_operand.vmem [shape: f32[8,32], index: 2, kind: input, shape index: {}]
  %s3 = inlined_call_operand.vmem [shape: f32[3,32,32], index: 3, kind: input, shape index: {}]
  %s4 = inlined_call_operand.vmem [shape: f32[1,32], index: 4, kind: input, shape index: {}]
  %s5 = inlined_call_operand.vmem [shape: f32[32,64], index: 5, kind: input, shape index: {}]
  %s6 = inlined_call_operand.vmem [shape: f32[32,64], index: 6, kind: input, shape index: {}]
  %s7 = inlined_call_operand.vmem [shape: f32[1,64], index: 7, kind: input, shape index: {}]
  %s8 = inlined_call_operand.vmem [shape: f32[64,4], index: 8, kind: input, shape index: {}]
  %s9 = inlined_call_operand.vmem [shape: f32[1,4], index: 9, kind: input, shape index: {}]
  %s10 = inlined_call_operand.vmem [shape: f32[8,4], index: 10, kind: output, shape index: {}]
  %s11 = sld [smem:[#allocation0]]
  $region50: #{tpu_custom_call.1} parent=0
    _
  %s13 = ssub.s32 1, %s11
  %s14 = scalar_select 0, %s13, %s11
  // Predicated region
  $region2: #{tpu_custom_call.1} parent=0 // pred_check
    _
  $region3: #{tpu_custom_call.1} parent=0 // pred_check_branch
    %16 = sbr.rel (0) target = $region5
  $region4: #{tpu_custom_call.1} parent=0 // pred_region
    _
  $region5: #{tpu_custom_call.1} parent=0 // pred_fallthru
    _
  // Predicated region
  $region6: #{tpu_custom_call.1} parent=0 // pred_check
    _
  $region7: #{tpu_custom_call.1} parent=0 // pred_check_branch
    %18 = sbr.rel (0) target = $region9
  $region8: #{tpu_custom_call.1} parent=0 // pred_region
    _
  $region9: #{tpu_custom_call.1} parent=0 // pred_fallthru
    _
  // Predicated region
  $region10: #{tpu_custom_call.1} parent=0 // pred_check
    _
  $region11: #{tpu_custom_call.1} parent=0 // pred_check_branch
    %20 = sbr.rel (0) target = $region13
  $region12: #{tpu_custom_call.1} parent=0 // pred_region
    _
  $region13: #{tpu_custom_call.1} parent=0 // pred_fallthru
    _
  // Predicated region
  $region14: #{tpu_custom_call.1} parent=0 // pred_check
    _
  $region15: #{tpu_custom_call.1} parent=0 // pred_check_branch
    %22 = sbr.rel (0) target = $region17
  $region16: #{tpu_custom_call.1} parent=0 // pred_region
    _
  $region17: #{tpu_custom_call.1} parent=0 // pred_fallthru
    _
  // Predicated region
  $region18: #{tpu_custom_call.1} parent=0 // pred_check
    _
  $region19: #{tpu_custom_call.1} parent=0 // pred_check_branch
    %24 = sbr.rel (0) target = $region21
  $region20: #{tpu_custom_call.1} parent=0 // pred_region
    _
  $region21: #{tpu_custom_call.1} parent=0 // pred_fallthru
    _
  // Predicated region
  $region22: #{tpu_custom_call.1} parent=0 // pred_check
    _
  $region23: #{tpu_custom_call.1} parent=0 // pred_check_branch
    %26 = sbr.rel (0) target = $region25
  $region24: #{tpu_custom_call.1} parent=0 // pred_region
    _
  $region25: #{tpu_custom_call.1} parent=0 // pred_fallthru
    _
  // Predicated region
  $region26: #{tpu_custom_call.1} parent=0 // pred_check
    _
  $region27: #{tpu_custom_call.1} parent=0 // pred_check_branch
    %28 = sbr.rel (0) target = $region29
  $region28: #{tpu_custom_call.1} parent=0 // pred_region
    _
  $region29: #{tpu_custom_call.1} parent=0 // pred_fallthru
    _
  // Predicated region
  $region30: #{tpu_custom_call.1} parent=0 // pred_check
    _
  $region31: #{tpu_custom_call.1} parent=0 // pred_check_branch
    %30 = sbr.rel (0) target = $region33
  $region32: #{tpu_custom_call.1} parent=0 // pred_region
    _
  $region33: #{tpu_custom_call.1} parent=0 // pred_fallthru
    _
  // Predicated region
  $region34: #{tpu_custom_call.1} parent=0 // pred_check
    _
  $region35: #{tpu_custom_call.1} parent=0 // pred_check_branch
    %32 = sbr.rel (0) target = $region37
  $region36: #{tpu_custom_call.1} parent=0 // pred_region
    _
  $region37: #{tpu_custom_call.1} parent=0 // pred_fallthru
    _
  // Predicated region
  $region38: #{tpu_custom_call.1} parent=0 // pred_check
    _
  $region39: #{tpu_custom_call.1} parent=0 // pred_check_branch
    %34 = sbr.rel (0) target = $region41
  $region40: #{tpu_custom_call.1} parent=0 // pred_region
    _
  $region41: #{tpu_custom_call.1} parent=0 // pred_fallthru
    _
  %v35 = vld [vmem:[%s0] sm:$0xff]
  %v36 = vld [vmem:[%s0 + $0x8] sm:$0xff]
  %v37 = vld [vmem:[%s0 + $0x10] sm:$0xff]
  %v38 = vld [vmem:[%s0 + $0x18] sm:$0xff]
  %v39 = vld [vmem:[%s0 + $0x20] sm:$0xff]
  %v40 = vld [vmem:[%s0 + $0x28] sm:$0xff]
  %v41 = vld [vmem:[%s0 + $0x30] sm:$0xff]
  %v42 = vld [vmem:[%s0 + $0x38] sm:$0xff]
  %v43 = vld [vmem:[%s3] sm:$0xff]
  %v44 = vld [vmem:[%s3 + $0x8] sm:$0xff]
  %v45 = vld [vmem:[%s3 + $0x10] sm:$0xff]
  %v46 = vld [vmem:[%s3 + $0x18] sm:$0xff]
  %vm55 = vcmask 1046528
  %v56 = vrot.slane %v35, 1
  %v57 = vrot.slane %v36, 1
  %v58 = vsel %vm55, %v56, %v57
  %v59 = vrot.slane %v37, 1
  %v60 = vsel %vm55, %v57, %v59
  %v61 = vrot.slane %v38, 1
  %v62 = vsel %vm55, %v59, %v61
  %v63 = vrot.slane %v39, 1
  %v64 = vsel %vm55, %v61, %v63
  %v65 = vrot.slane %v40, 1
  %v66 = vsel %vm55, %v63, %v65
  %v67 = vrot.slane %v41, 1
  %v68 = vsel %vm55, %v65, %v67
  %v69 = vrot.slane %v42, 1
  %v70 = vsel %vm55, %v67, %v69
  %v72 = vsel %vm55, %v69, 0.0
  %s73 = scalar_lea.vmem %s3, 32
  %v74 = vld [vmem:[%s73] sm:$0xff]
  %v75 = vld [vmem:[%s73 + $0x8] sm:$0xff]
  %v76 = vld [vmem:[%s73 + $0x10] sm:$0xff]
  %v77 = vld [vmem:[%s73 + $0x18] sm:$0xff]
  %vm78 = vcmask 261120
  %v79 = vsel %vm78, %v58, 0
  %v81 = vsel %vm78, %v60, 0
  %v83 = vsel %vm78, %v62, 0
  %v85 = vsel %vm78, %v64, 0
  %v87 = vsel %vm78, %v66, 0
  %v89 = vsel %vm78, %v68, 0
  %v91 = vsel %vm78, %v70, 0
  %v94 = vsel %vm78, %v72, 0
  %96 = vmatpush.msra.mxu0 0.0
  %97 = vmatpush.msra.mxu0 0.0
  %98 = vmatpush.msra.mxu0 0.0
  %99 = vmatpush.msra.mxu0 0.0
  %100 = vmatpush.msra.mxu0 0.0
  %101 = vmatpush.msra.mxu0 0.0
  %102 = vmatpush.msra.mxu0 0.0
  %103 = vmatpush.msra.mxu0 0.0
  %104 = vmatpush.msra.mxu0 0.0
  %105 = vmatpush.msra.mxu0 0.0
  %106 = vmatpush.msra.mxu0 0.0
  %107 = vmatpush.msra.mxu0 0.0
  %108 = vmatpush.msra.mxu0 %v77
  %109 = vmatpush.msra.mxu0 %v76
  %110 = vmatpush.msra.mxu0 %v75
  %111 = vmatpush.msra.mxu0 %v74
  %112 = vmatmul.f32.gmra.mxu0 %v79
  %v113 = vpop.f32.mrf.mxu0
  %v114 = vadd.f32 0.0, %v113
  %115 = vmatmul.f32.gmra.mxu0 %v81
  %v116 = vpop.f32.mrf.mxu0
  %v117 = vadd.f32 0.0, %v116
  %118 = vmatmul.f32.gmra.mxu0 %v83
  %v119 = vpop.f32.mrf.mxu0
  %v120 = vadd.f32 0.0, %v119
  %121 = vmatmul.f32.gmra.mxu0 %v85
  %v122 = vpop.f32.mrf.mxu0
  %v123 = vadd.f32 0.0, %v122
  %124 = vmatmul.f32.gmra.mxu0 %v87
  %v125 = vpop.f32.mrf.mxu0
  %v126 = vadd.f32 0.0, %v125
  %127 = vmatmul.f32.gmra.mxu0 %v89
  %v128 = vpop.f32.mrf.mxu0
  %v129 = vadd.f32 0.0, %v128
  %130 = vmatmul.f32.gmra.mxu0 %v91
  %v131 = vpop.f32.mrf.mxu0
  %v132 = vadd.f32 0.0, %v131
  %133 = vmatmul.f32.gmra.mxu0 %v94
  %v134 = vpop.f32.mrf.mxu0
  %v135 = vadd.f32 0.0, %v134
  %136 = vdwg.mxu0
  %v137 = vsel %vm78, %v35, 0
  %v139 = vsel %vm78, %v36, 0
  %v141 = vsel %vm78, %v37, 0
  %v143 = vsel %vm78, %v38, 0
  %v145 = vsel %vm78, %v39, 0
  %v147 = vsel %vm78, %v40, 0
  %v149 = vsel %vm78, %v41, 0
  %v151 = vsel %vm78, %v42, 0
  %153 = vmatpush.msra.mxu0 0.0
  %154 = vmatpush.msra.mxu0 0.0
  %155 = vmatpush.msra.mxu0 0.0
  %156 = vmatpush.msra.mxu0 0.0
  %157 = vmatpush.msra.mxu0 0.0
  %158 = vmatpush.msra.mxu0 0.0
  %159 = vmatpush.msra.mxu0 0.0
  %160 = vmatpush.msra.mxu0 0.0
  %161 = vmatpush.msra.mxu0 0.0
  %162 = vmatpush.msra.mxu0 0.0
  %163 = vmatpush.msra.mxu0 0.0
  %164 = vmatpush.msra.mxu0 0.0
  %165 = vmatpush.msra.mxu0 %v46
  %166 = vmatpush.msra.mxu0 %v45
  %167 = vmatpush.msra.mxu0 %v44
  %168 = vmatpush.msra.mxu0 %v43
  %169 = vmatmul.f32.gmra.mxu0 %v137
  %v170 = vpop.f32.mrf.mxu0
  %v171 = vadd.f32 %v114, %v170
  %172 = vmatmul.f32.gmra.mxu0 %v139
  %v173 = vpop.f32.mrf.mxu0
  %v174 = vadd.f32 %v117, %v173
  %175 = vmatmul.f32.gmra.mxu0 %v141
  %v176 = vpop.f32.mrf.mxu0
  %v177 = vadd.f32 %v120, %v176
  %178 = vmatmul.f32.gmra.mxu0 %v143
  %v179 = vpop.f32.mrf.mxu0
  %v180 = vadd.f32 %v123, %v179
  %181 = vmatmul.f32.gmra.mxu0 %v145
  %v182 = vpop.f32.mrf.mxu0
  %v183 = vadd.f32 %v126, %v182
  %184 = vmatmul.f32.gmra.mxu0 %v147
  %v185 = vpop.f32.mrf.mxu0
  %v186 = vadd.f32 %v129, %v185
  %187 = vmatmul.f32.gmra.mxu0 %v149
  %v188 = vpop.f32.mrf.mxu0
  %v189 = vadd.f32 %v132, %v188
  %190 = vmatmul.f32.gmra.mxu0 %v151
  %v191 = vpop.f32.mrf.mxu0
  %v192 = vadd.f32 %v135, %v191
  %193 = vdwg.mxu0
  %vm194 = vcmask 1045504
  %v195 = vrot.slane %v35, 2
  %v196 = vrot.slane %v36, 2
  %v197 = vsel %vm194, %v195, %v196
  %v198 = vrot.slane %v37, 2
  %v199 = vsel %vm194, %v196, %v198
  %v200 = vrot.slane %v38, 2
  %v201 = vsel %vm194, %v198, %v200
  %v202 = vrot.slane %v39, 2
  %v203 = vsel %vm194, %v200, %v202
  %v204 = vrot.slane %v40, 2
  %v205 = vsel %vm194, %v202, %v204
  %v206 = vrot.slane %v41, 2
  %v207 = vsel %vm194, %v204, %v206
  %v208 = vrot.slane %v42, 2
  %v209 = vsel %vm194, %v206, %v208
  %v211 = vsel %vm194, %v208, 0.0
  %s212 = scalar_lea.vmem %s3, 64
  %v213 = vld [vmem:[%s212] sm:$0xff]
  %v214 = vld [vmem:[%s212 + $0x8] sm:$0xff]
  %v215 = vld [vmem:[%s212 + $0x10] sm:$0xff]
  %v216 = vld [vmem:[%s212 + $0x18] sm:$0xff]
  %v217 = vsel %vm78, %v197, 0
  %v219 = vsel %vm78, %v199, 0
  %v221 = vsel %vm78, %v201, 0
  %v223 = vsel %vm78, %v203, 0
  %v225 = vsel %vm78, %v205, 0
  %v227 = vsel %vm78, %v207, 0
  %v229 = vsel %vm78, %v209, 0
  %v232 = vsel %vm78, %v211, 0
  %234 = vmatpush.msra.mxu0 0.0
  %235 = vmatpush.msra.mxu0 0.0
  %236 = vmatpush.msra.mxu0 0.0
  %237 = vmatpush.msra.mxu0 0.0
  %238 = vmatpush.msra.mxu0 0.0
  %239 = vmatpush.msra.mxu0 0.0
  %240 = vmatpush.msra.mxu0 0.0
  %241 = vmatpush.msra.mxu0 0.0
  %242 = vmatpush.msra.mxu0 0.0
  %243 = vmatpush.msra.mxu0 0.0
  %244 = vmatpush.msra.mxu0 0.0
  %245 = vmatpush.msra.mxu0 0.0
  %246 = vmatpush.msra.mxu0 %v216
  %247 = vmatpush.msra.mxu0 %v215
  %248 = vmatpush.msra.mxu0 %v214
  %249 = vmatpush.msra.mxu0 %v213
  %250 = vmatmul.f32.gmra.mxu0 %v217
  %v251 = vpop.f32.mrf.mxu0
  %v252 = vadd.f32 0.0, %v251
  %253 = vmatmul.f32.gmra.mxu0 %v219
  %v254 = vpop.f32.mrf.mxu0
  %v255 = vadd.f32 0.0, %v254
  %256 = vmatmul.f32.gmra.mxu0 %v221
  %v257 = vpop.f32.mrf.mxu0
  %v258 = vadd.f32 0.0, %v257
  %259 = vmatmul.f32.gmra.mxu0 %v223
  %v260 = vpop.f32.mrf.mxu0
  %v261 = vadd.f32 0.0, %v260
  %262 = vmatmul.f32.gmra.mxu0 %v225
  %v263 = vpop.f32.mrf.mxu0
  %v264 = vadd.f32 0.0, %v263
  %265 = vmatmul.f32.gmra.mxu0 %v227
  %v266 = vpop.f32.mrf.mxu0
  %v267 = vadd.f32 0.0, %v266
  %268 = vmatmul.f32.gmra.mxu0 %v229
  %v269 = vpop.f32.mrf.mxu0
  %v270 = vadd.f32 0.0, %v269
  %271 = vmatmul.f32.gmra.mxu0 %v232
  %v272 = vpop.f32.mrf.mxu0
  %v273 = vadd.f32 0.0, %v272
  %274 = vdwg.mxu0
  %v275 = vadd.f32 %v171, %v252
  %v276 = vadd.f32 %v174, %v255
  %v277 = vadd.f32 %v177, %v258
  %v278 = vadd.f32 %v180, %v261
  %v279 = vadd.f32 %v183, %v264
  %v280 = vadd.f32 %v186, %v267
  %v281 = vadd.f32 %v189, %v270
  %v282 = vadd.f32 %v192, %v273
  %v283 = vld [vmem:[%s4] sm:$0x1]
  %v285 = vperm.slane %v283, 0
  %v287 = vadd.f32 %v275, %v285
  %v288 = vadd.f32 %v276, %v285
  %v289 = vadd.f32 %v277, %v285
  %v290 = vadd.f32 %v278, %v285
  %v291 = vadd.f32 %v279, %v285
  %v292 = vadd.f32 %v280, %v285
  %v293 = vadd.f32 %v281, %v285
  %v294 = vadd.f32 %v282, %v285
  %v295 = vmax.f32 %v287, 0.0
  %v296 = vmax.f32 %v288, 0.0
  %v297 = vmax.f32 %v289, 0.0
  %v298 = vmax.f32 %v290, 0.0
  %v299 = vmax.f32 %v291, 0.0
  %v300 = vmax.f32 %v292, 0.0
  %v301 = vmax.f32 %v293, 0.0
  %v302 = vmax.f32 %v294, 0.0
  %v303 = vld [vmem:[%s1] sm:$0xff]
  %v304 = vld [vmem:[%s1 + $0x8] sm:$0xff]
  %v305 = vld [vmem:[%s1 + $0x10] sm:$0xff]
  %v306 = vld [vmem:[%s1 + $0x18] sm:$0xff]
  %v307 = vld [vmem:[%s1 + $0x20] sm:$0xff]
  %v308 = vld [vmem:[%s1 + $0x28] sm:$0xff]
  %v309 = vld [vmem:[%s1 + $0x30] sm:$0xff]
  %v310 = vld [vmem:[%s1 + $0x38] sm:$0xff]
  %312 = vset.pattern.permute.xlu0 0
  %313 = vperm.xlu0 %312, %v303
  %v314 = vpop.permute.xlu0 %313
  %317 = vset.pattern.permute.xlu0 0
  %318 = vperm.xlu0 %317, %v304
  %v319 = vpop.permute.xlu0 %318
  %322 = vset.pattern.permute.xlu0 0
  %323 = vperm.xlu0 %322, %v305
  %v324 = vpop.permute.xlu0 %323
  %327 = vset.pattern.permute.xlu0 0
  %328 = vperm.xlu0 %327, %v306
  %v329 = vpop.permute.xlu0 %328
  %332 = vset.pattern.permute.xlu0 0
  %333 = vperm.xlu0 %332, %v307
  %v334 = vpop.permute.xlu0 %333
  %337 = vset.pattern.permute.xlu0 0
  %338 = vperm.xlu0 %337, %v308
  %v339 = vpop.permute.xlu0 %338
  %342 = vset.pattern.permute.xlu0 0
  %343 = vperm.xlu0 %342, %v309
  %v344 = vpop.permute.xlu0 %343
  %347 = vset.pattern.permute.xlu0 0
  %348 = vperm.xlu0 %347, %v310
  %v349 = vpop.permute.xlu0 %348
  %v351 = vmul.f32 %v295, %v314
  %v352 = vmul.f32 %v296, %v319
  %v353 = vmul.f32 %v297, %v324
  %v354 = vmul.f32 %v298, %v329
  %v355 = vmul.f32 %v299, %v334
  %v356 = vmul.f32 %v300, %v339
  %v357 = vmul.f32 %v301, %v344
  %v358 = vmul.f32 %v302, %v349
  %v359 = vsel %vm78, %v351, 0.0
  %v360 = vrot.slane %v359, 4
  %v361 = vadd.f32 %v359, %v360
  %v362 = vrot.slane %v361, 2
  %v363 = vadd.f32 %v361, %v362
  %v364 = vrot.slane %v363, 1
  %v365 = vadd.f32 %v363, %v364
  %v366 = vsel %vm78, %v352, 0.0
  %v367 = vrot.slane %v366, 4
  %v368 = vadd.f32 %v366, %v367
  %v369 = vrot.slane %v368, 2
  %v370 = vadd.f32 %v368, %v369
  %v371 = vrot.slane %v370, 1
  %v372 = vadd.f32 %v370, %v371
  %v373 = vsel %vm78, %v353, 0.0
  %v374 = vrot.slane %v373, 4
  %v375 = vadd.f32 %v373, %v374
  %v376 = vrot.slane %v375, 2
  %v377 = vadd.f32 %v375, %v376
  %v378 = vrot.slane %v377, 1
  %v379 = vadd.f32 %v377, %v378
  %v380 = vsel %vm78, %v354, 0.0
  %v381 = vrot.slane %v380, 4
  %v382 = vadd.f32 %v380, %v381
  %v383 = vrot.slane %v382, 2
  %v384 = vadd.f32 %v382, %v383
  %v385 = vrot.slane %v384, 1
  %v386 = vadd.f32 %v384, %v385
  %v387 = vsel %vm78, %v355, 0.0
  %v388 = vrot.slane %v387, 4
  %v389 = vadd.f32 %v387, %v388
  %v390 = vrot.slane %v389, 2
  %v391 = vadd.f32 %v389, %v390
  %v392 = vrot.slane %v391, 1
  %v393 = vadd.f32 %v391, %v392
  %v394 = vsel %vm78, %v356, 0.0
  %v395 = vrot.slane %v394, 4
  %v396 = vadd.f32 %v394, %v395
  %v397 = vrot.slane %v396, 2
  %v398 = vadd.f32 %v396, %v397
  %v399 = vrot.slane %v398, 1
  %v400 = vadd.f32 %v398, %v399
  %v401 = vsel %vm78, %v357, 0.0
  %v402 = vrot.slane %v401, 4
  %v403 = vadd.f32 %v401, %v402
  %v404 = vrot.slane %v403, 2
  %v405 = vadd.f32 %v403, %v404
  %v406 = vrot.slane %v405, 1
  %v407 = vadd.f32 %v405, %v406
  %v408 = vsel %vm78, %v358, 0.0
  %v409 = vrot.slane %v408, 4
  %v410 = vadd.f32 %v408, %v409
  %v411 = vrot.slane %v410, 2
  %v412 = vadd.f32 %v410, %v411
  %v413 = vrot.slane %v412, 1
  %v414 = vadd.f32 %v412, %v413
  %v415 = vld [vmem:[%s2] sm:$0xff]
  %v416 = vld [vmem:[%s5] sm:$0xff]
  %v417 = vld [vmem:[%s5 + $0x8] sm:$0xff]
  %v418 = vld [vmem:[%s5 + $0x10] sm:$0xff]
  %v419 = vld [vmem:[%s5 + $0x18] sm:$0xff]
  %v420 = vld [vmem:[%s6] sm:$0xff]
  %v421 = vld [vmem:[%s6 + $0x8] sm:$0xff]
  %v422 = vld [vmem:[%s6 + $0x10] sm:$0xff]
  %v423 = vld [vmem:[%s6 + $0x18] sm:$0xff]
  %vm432 = vcmask 1041409
  %v433 = vsel %vm432, %v372, %v365
  %vm434 = vcmask 1042434
  %v435 = vsel %vm434, %v379, %v433
  %vm436 = vcmask 1043459
  %v437 = vsel %vm436, %v386, %v435
  %vm438 = vcmask 1044484
  %v439 = vsel %vm438, %v393, %v437
  %vm440 = vcmask 1045509
  %v441 = vsel %vm440, %v400, %v439
  %vm442 = vcmask 1046534
  %v443 = vsel %vm442, %v407, %v441
  %vm444 = vcmask 1047559
  %v445 = vsel %vm444, %v414, %v443
  %v446 = vsel %vm78, %v445, 0
  %448 = vmatpush.msra.mxu0 0.0
  %449 = vmatpush.msra.mxu0 0.0
  %450 = vmatpush.msra.mxu0 0.0
  %451 = vmatpush.msra.mxu0 0.0
  %452 = vmatpush.msra.mxu0 0.0
  %453 = vmatpush.msra.mxu0 0.0
  %454 = vmatpush.msra.mxu0 0.0
  %455 = vmatpush.msra.mxu0 0.0
  %456 = vmatpush.msra.mxu0 0.0
  %457 = vmatpush.msra.mxu0 0.0
  %458 = vmatpush.msra.mxu0 0.0
  %459 = vmatpush.msra.mxu0 0.0
  %460 = vmatpush.msra.mxu0 %v423
  %461 = vmatpush.msra.mxu0 %v422
  %462 = vmatpush.msra.mxu0 %v421
  %463 = vmatpush.msra.mxu0 %v420
  %464 = vmatmul.f32.gmra.mxu0 %v446
  %v465 = vpop.f32.mrf.mxu0
  %v466 = vadd.f32 0.0, %v465
  %467 = vdwg.mxu0
  %v469 = vsel %vm78, %v415, 0
  %471 = vmatpush.msra.mxu0 0.0
  %472 = vmatpush.msra.mxu0 0.0
  %473 = vmatpush.msra.mxu0 0.0
  %474 = vmatpush.msra.mxu0 0.0
  %475 = vmatpush.msra.mxu0 0.0
  %476 = vmatpush.msra.mxu0 0.0
  %477 = vmatpush.msra.mxu0 0.0
  %478 = vmatpush.msra.mxu0 0.0
  %479 = vmatpush.msra.mxu0 0.0
  %480 = vmatpush.msra.mxu0 0.0
  %481 = vmatpush.msra.mxu0 0.0
  %482 = vmatpush.msra.mxu0 0.0
  %483 = vmatpush.msra.mxu0 %v419
  %484 = vmatpush.msra.mxu0 %v418
  %485 = vmatpush.msra.mxu0 %v417
  %486 = vmatpush.msra.mxu0 %v416
  %487 = vmatmul.f32.gmra.mxu0 %v469
  %v488 = vpop.f32.mrf.mxu0
  %v489 = vadd.f32 %v466, %v488
  %490 = vdwg.mxu0
  %v491 = vld [vmem:[%s7] sm:$0x1]
  %v493 = vperm.slane %v491, 0
  %v495 = vadd.f32 %v489, %v493
  %v496 = vxor.u32 %v495, 2147483648
  %v497 = vmul.f32 %v496, 1.442695
  %v498 = vpow.pop %v497
  %v499 = vadd.f32 %v498, 1.0
  %v500 = vrcp.pop %v499
  %v501 = vmul.f32 %v499, %v500
  %v502 = vsub.f32 1.0, %v501
  %v503 = vmul.f32 %v500, %v502
  %v504 = vadd.f32 %v500, %v503
  %vm505 = vweird.f32 %v499
  %vm506 = vweird.f32 %v500
  %vm507 = vmor %vm505, %vm506
  %v508 = vsel %vm507, %v500, %v504
  %v509 = vand.u32 2147483647, %v499
  %vm510 = vcmp.eq.f32.partialorder %v509, 8.507059e+37
  %v511 = vand.u32 %v499, 2147483648
  %v512 = vor.u32 1.1754944e-38, %v511
  %v513 = vsel %vm510, %v512, %v508
  %v514 = vmul.f32 1.0, %v513
  %v515 = vmul.f32 %v495, %v514
  %v516 = vld [vmem:[%s8] sm:$0xff]
  %v517 = vld [vmem:[%s8 + $0x8] sm:$0xff]
  %v518 = vld [vmem:[%s8 + $0x10] sm:$0xff]
  %v519 = vld [vmem:[%s8 + $0x18] sm:$0xff]
  %v520 = vld [vmem:[%s8 + $0x20] sm:$0xff]
  %v521 = vld [vmem:[%s8 + $0x28] sm:$0xff]
  %v522 = vld [vmem:[%s8 + $0x30] sm:$0xff]
  %v523 = vld [vmem:[%s8 + $0x38] sm:$0xff]
  %v524 = vld [vmem:[%s9] sm:$0x1]
  %v526 = vperm.slane %v524, 0
  %vm528 = vcmask 523264
  %v530 = vsel %vm528, %v515, 0
  %532 = vmatpush.msra.mxu0 0.0
  %533 = vmatpush.msra.mxu0 0.0
  %534 = vmatpush.msra.mxu0 0.0
  %535 = vmatpush.msra.mxu0 0.0
  %536 = vmatpush.msra.mxu0 0.0
  %537 = vmatpush.msra.mxu0 0.0
  %538 = vmatpush.msra.mxu0 0.0
  %539 = vmatpush.msra.mxu0 0.0
  %540 = vmatpush.msra.mxu0 %v523
  %541 = vmatpush.msra.mxu0 %v522
  %542 = vmatpush.msra.mxu0 %v521
  %543 = vmatpush.msra.mxu0 %v520
  %544 = vmatpush.msra.mxu0 %v519
  %545 = vmatpush.msra.mxu0 %v518
  %546 = vmatpush.msra.mxu0 %v517
  %547 = vmatpush.msra.mxu0 %v516
  %548 = vmatmul.f32.gmra.mxu0 %v530
  %v549 = vpop.f32.mrf.mxu0
  %v550 = vadd.f32 %v526, %v549
  %551 = vdwg.mxu0
  %vm552 = vcmask 31744
  %553 = vst.msk [vmem:[%s10] sm:$0xff] %vm552, %v550
  // Predicated region
  $region42: #{tpu_custom_call.1} parent=0 // pred_check
    _
  $region43: #{tpu_custom_call.1} parent=0 // pred_check_branch
    %555 = sbr.rel (0) target = $region45
  $region44: #{tpu_custom_call.1} parent=0 // pred_region
    _
  $region45: #{tpu_custom_call.1} parent=0 // pred_fallthru
    _
  // Predicated region
  $region46: #{tpu_custom_call.1} parent=0 // pred_check
    _
  $region47: #{tpu_custom_call.1} parent=0 // pred_check_branch
    %557 = sbr.rel (0) target = $region49
  $region48: #{tpu_custom_call.1} parent=0 // pred_region
    _
  $region49: #{tpu_custom_call.1} parent=0 // pred_fallthru
    _

</llo_original>
